<compile_context>
chip_gen: v5e
topology: v5e:2x2
jax: 0.10.0
libtpu: 0.0.40
codegen_flags: <defaults>
</compile_context>

<pallas_src>
import jax
import jax.numpy as jnp
import numpy as np
from jax.experimental import pallas as pl
from jax.experimental.pallas import tpu as pltpu

LOG_2PI = float(np.log(2.0 * np.pi))


def spn_forward_kernel(
    xT_ref,       # (NL, TB)  input variable values, batch on lanes (bf16)
    margT_ref,    # (NL, TB)  marginalization mask (int8): 1 -> marginalized
    mean_ref,     # (NL, 1)   Gaussian means
    inv_std_ref,  # (NL, 1)   1/std                    (pre-folded: exp(-logstd))
    bias_ref,     # (NL, 1)   -logstd - log(2*pi)/2    (pre-folded)
    connT_ref,    # (NP, NL)  product connections (0/1), transposed
    wsT_ref,      # (NS, NP)  sum weights * connections, transposed
    wrT_ref,      # (1, NS)   root weights * connections, transposed
    out_ref,      # (1, TB)   root log-value, batch on lanes (lane-dense store)
):
    x = xT_ref[...].astype(jnp.float32)
    marg = margT_ref[...].astype(jnp.float32)

    # ---- Gaussian leaf layer (log-density); marginalized vars contribute 0 ----
    z = (x - mean_ref[...]) * inv_std_ref[...]
    leaf = -0.5 * (z * z) + bias_ref[...]
    leaf = jnp.where(marg > 0.0, 0.0, leaf)                                   # (NL, TB)

    # ---- Product layer: sum of child log-values over connections ----
    prod = jnp.dot(connT_ref[...], leaf, preferred_element_type=jnp.float32)  # (NP, TB)

    # ---- Sum layer: weighted logsumexp via max trick (node axis = sublanes) ----
    m1 = jnp.max(prod, axis=0, keepdims=True)                                 # (1, TB)
    e1 = jnp.exp(prod - m1)
    s1 = jnp.dot(wsT_ref[...], e1, preferred_element_type=jnp.float32)        # (NS, TB)
    sumv = jnp.log(s1) + m1

    # ---- Root sum node ----
    m2 = jnp.max(sumv, axis=0, keepdims=True)                                 # (1, TB)
    e2 = jnp.exp(sumv - m2)
    s2 = jnp.dot(wrT_ref[...], e2, preferred_element_type=jnp.float32)        # (1, TB)
    out_ref[...] = jnp.log(s2) + m2


def _round_up(v, m):
    return ((v + m - 1) // m) * m


def spn_forward(xT, margT, mean, logstd, conn_prod, w_sum, conn_sum,
                w_root, conn_root, *, batch_tile=2048):
    """Fused layerwise-SPN forward.

    xT, margT : (NL, B)  variables on sublanes, batch on the 128-lane axis.
    Returns (B, 1) root log-values (same as the module's last-layer output).
    """
    NL, B = xT.shape
    NP = conn_prod.shape[1]
    NS = w_sum.shape[1]

    # Pre-fold per-model constants once on the host (not per grid step).
    mean2 = mean.reshape(NL, 1).astype(jnp.float32)
    inv_std = jnp.exp(-logstd).reshape(NL, 1).astype(jnp.float32)
    bias = (-logstd - 0.5 * LOG_2PI).reshape(NL, 1).astype(jnp.float32)
    connT = conn_prod.T.astype(jnp.float32)               # (NP, NL)
    wsT = (w_sum * conn_sum).T.astype(jnp.float32)        # (NS, NP)
    wrT = (w_root * conn_root).T.astype(jnp.float32)      # (1, NS)

    # Compact input dtypes for a bandwidth-bound kernel.
    xT = xT.astype(jnp.bfloat16)
    margT = (margT > 0).astype(jnp.int8)

    # Big lane-dense batch tile, clamped so small batches don't over-pad.
    TB = min(_round_up(int(batch_tile), 128), _round_up(B, 128))
    nb = pl.cdiv(B, TB)
    Bp = nb * TB
    if Bp != B:
        # Padded columns are fully marginalized (mask = 1) so they stay finite;
        # they are sliced off below.
        xT = jnp.pad(xT, ((0, 0), (0, Bp - B)))
        margT = jnp.pad(margT, ((0, 0), (0, Bp - B)), constant_values=1)

    out = pl.pallas_call(
        spn_forward_kernel,
        out_shape=jax.ShapeDtypeStruct((1, Bp), jnp.float32),
        grid=(nb,),
        in_specs=[
            pl.BlockSpec((NL, TB), lambda i: (0, i)),    # xT    : tiled over batch
            pl.BlockSpec((NL, TB), lambda i: (0, i)),    # margT : tiled over batch
            pl.BlockSpec((NL, 1), lambda i: (0, 0)),     # mean  : VMEM-resident
            pl.BlockSpec((NL, 1), lambda i: (0, 0)),     # inv_std
            pl.BlockSpec((NL, 1), lambda i: (0, 0)),     # bias
            pl.BlockSpec((NP, NL), lambda i: (0, 0)),    # connT
            pl.BlockSpec((NS, NP), lambda i: (0, 0)),    # wsT
            pl.BlockSpec((1, NS), lambda i: (0, 0)),     # wrT
        ],
        out_specs=pl.BlockSpec((1, TB), lambda i: (0, i)),
        compiler_params=pltpu.CompilerParams(
            dimension_semantics=("parallel",),           # batch tiles independent
        ),
    )(xT, margT, mean2, inv_std, bias, connT, wsT, wrT)

    return out[:, :B].T                                   # (B, 1)


def spn_forward_ref(xT, margT, mean, logstd, conn_prod, w_sum, conn_sum,
                    w_root, conn_root):
    """Pure-JAX reference for validation (same math, batch-major layout)."""
    x = xT.astype(jnp.float32).T                          # (B, NL)
    marg = margT.astype(jnp.float32).T
    inv_std = jnp.exp(-logstd)
    z = (x - mean) * inv_std
    leaf = -0.5 * z * z - logstd - 0.5 * LOG_2PI
    leaf = jnp.where(marg > 0.0, 0.0, leaf)
    prod = leaf @ conn_prod
    m1 = jnp.max(prod, axis=-1, keepdims=True)
    sumv = jnp.log(jnp.exp(prod - m1) @ (w_sum * conn_sum)) + m1
    m2 = jnp.max(sumv, axis=-1, keepdims=True)
    return jnp.log(jnp.exp(sumv - m2) @ (w_root * conn_root)) + m2


if __name__ == "__main__":
    B, NL, NP, NS = 320, 32, 16, 8   # batch, leaves, product nodes, sum nodes

    key = jax.random.PRNGKey(0)
    kx, km, ks, kw1, kw2 = jax.random.split(key, 5)

    # Inputs in [variables, batch] layout (batch on the 128-lane axis).
    # bf16 values + int8 marginalization mask keep the memory-bound kernel lean.
    x = jax.random.normal(kx, (NL, B), dtype=jnp.float32).astype(jnp.bfloat16)
    marg_np = np.zeros((NL, B), dtype=np.int8)
    marg_np[::7, ::3] = 1                           # marginalize a sparse pattern
    marg = jnp.asarray(marg_np)

    # Gaussian leaf parameters.
    mean = jax.random.normal(km, (NL,), dtype=jnp.float32) * 0.5
    std = jax.random.uniform(ks, (NL,), dtype=jnp.float32, minval=0.5, maxval=1.5)
    logstd = jnp.log(std)

    # Product edges: each product node connects to a disjoint pair of leaves.
    conn_prod_np = np.zeros((NL, NP), dtype=np.float32)
    for j in range(NP):
        conn_prod_np[2 * j, j] = 1.0
        conn_prod_np[2 * j + 1, j] = 1.0
    conn_prod = jnp.asarray(conn_prod_np)

    # Sum edges: fully connected with deterministic positive weights.
    w_sum = jax.random.uniform(kw1, (NP, NS), dtype=jnp.float32, minval=0.1, maxval=1.0)
    conn_sum = jnp.ones((NP, NS), dtype=jnp.float32)

    # Root sum node.
    w_root = jax.random.uniform(kw2, (NS, 1), dtype=jnp.float32, minval=0.1, maxval=1.0)
    conn_root = jnp.ones((NS, 1), dtype=jnp.float32)

    args = (x, marg, mean, logstd, conn_prod, w_sum, conn_sum, w_root, conn_root)

    # batch_tile=256 here exercises both multi-tile pipelining and batch padding
    # (320 -> 2 tiles of 256, padded tail fully marginalized).
    out = spn_forward(*args, batch_tile=256)
    out = jax.block_until_ready(out)
    assert out.shape == (B, 1)

    ref = spn_forward_ref(*args)
    np.testing.assert_allclose(np.asarray(out), np.asarray(ref), rtol=1e-5, atol=1e-5)

    # TODO(synk): compute_probability (second marginalized pass + NLL backward)
    # is not kernelized; only the forward log-value is.
    print("KERNEL_OK")
</pallas_src>

<mosaic_0001>
module attributes {stable_mosaic.version = 11 : i64} {
  func.func @spn_forward_kernel(%arg0: i32, %arg1: memref<32x256xbf16, #tpu.memory_space<vmem>>, %arg2: memref<32x256xi8, #tpu.memory_space<vmem>>, %arg3: memref<32x1xf32, #tpu.memory_space<vmem>>, %arg4: memref<32x1xf32, #tpu.memory_space<vmem>>, %arg5: memref<32x1xf32, #tpu.memory_space<vmem>>, %arg6: memref<16x32xf32, #tpu.memory_space<vmem>>, %arg7: memref<8x16xf32, #tpu.memory_space<vmem>>, %arg8: memref<1x8xf32, #tpu.memory_space<vmem>>, %arg9: memref<1x256xf32, #tpu.memory_space<vmem>>) attributes {dimension_semantics = [#tpu.dimension_semantics<parallel>], iteration_bounds = array<i64: 2>, scalar_prefetch = 0 : i64, scratch_operands = 0 : i64, tpu.core_type = #tpu.core_type<tc>, window_params = [{transform_indices = @transform_0, window_bounds = array<i64: 32, 256>}, {transform_indices = @transform_1, window_bounds = array<i64: 32, 256>}, {pipeline_mode = #tpu.pipeline_mode<synchronous>, transform_indices = @transform_2, window_bounds = array<i64: 32, 1>}, {pipeline_mode = #tpu.pipeline_mode<synchronous>, transform_indices = @transform_3, window_bounds = array<i64: 32, 1>}, {pipeline_mode = #tpu.pipeline_mode<synchronous>, transform_indices = @transform_4, window_bounds = array<i64: 32, 1>}, {pipeline_mode = #tpu.pipeline_mode<synchronous>, transform_indices = @transform_5, window_bounds = array<i64: 16, 32>}, {pipeline_mode = #tpu.pipeline_mode<synchronous>, transform_indices = @transform_6, window_bounds = array<i64: 8, 16>}, {pipeline_mode = #tpu.pipeline_mode<synchronous>, transform_indices = @transform_7, window_bounds = array<i64: 1, 8>}, {transform_indices = @transform_8, window_bounds = array<i64: 1, 256>}]} {
    %c0 = arith.constant 0 : index
    %c0_0 = arith.constant 0 : index
    %0 = vector.load %arg1[%c0, %c0_0] : memref<32x256xbf16, #tpu.memory_space<vmem>>, vector<32x256xbf16>
    %1 = arith.extf %0 : vector<32x256xbf16> to vector<32x256xf32>
    %c0_1 = arith.constant 0 : index
    %c0_2 = arith.constant 0 : index
    %2 = vector.load %arg2[%c0_1, %c0_2] : memref<32x256xi8, #tpu.memory_space<vmem>>, vector<32x256xi8>
    %3 = arith.sitofp %2 : vector<32x256xi8> to vector<32x256xf32>
    %c0_3 = arith.constant 0 : index
    %c0_4 = arith.constant 0 : index
    %4 = vector.load %arg3[%c0_3, %c0_4] : memref<32x1xf32, #tpu.memory_space<vmem>>, vector<32x1xf32>
    %5 = vector.broadcast %4 : vector<32x1xf32> to vector<32x256xf32>
    %6 = arith.subf %1, %5 : vector<32x256xf32>
    %c0_5 = arith.constant 0 : index
    %c0_6 = arith.constant 0 : index
    %7 = vector.load %arg4[%c0_5, %c0_6] : memref<32x1xf32, #tpu.memory_space<vmem>>, vector<32x1xf32>
    %8 = vector.broadcast %7 : vector<32x1xf32> to vector<32x256xf32>
    %9 = arith.mulf %6, %8 : vector<32x256xf32>
    %10 = arith.mulf %9, %9 : vector<32x256xf32>
    %cst = arith.constant -5.000000e-01 : f32
    %11 = vector.broadcast %cst : f32 to vector<32x256xf32>
    %12 = arith.mulf %11, %10 : vector<32x256xf32>
    %c0_7 = arith.constant 0 : index
    %c0_8 = arith.constant 0 : index
    %13 = vector.load %arg5[%c0_7, %c0_8] : memref<32x1xf32, #tpu.memory_space<vmem>>, vector<32x1xf32>
    %14 = vector.broadcast %13 : vector<32x1xf32> to vector<32x256xf32>
    %15 = arith.addf %12, %14 : vector<32x256xf32>
    %cst_9 = arith.constant 0.000000e+00 : f32
    %16 = vector.broadcast %cst_9 : f32 to vector<32x256xf32>
    %17 = arith.cmpf ogt, %3, %16 : vector<32x256xf32>
    %cst_10 = arith.constant 0.000000e+00 : f32
    %18 = vector.broadcast %cst_10 : f32 to vector<32x256xf32>
    %19 = arith.select %17, %18, %15 : vector<32x256xi1>, vector<32x256xf32>
    %c0_11 = arith.constant 0 : index
    %c0_12 = arith.constant 0 : index
    %20 = vector.load %arg6[%c0_11, %c0_12] : memref<16x32xf32, #tpu.memory_space<vmem>>, vector<16x32xf32>
    %cst_13 = arith.constant dense<0.000000e+00> : vector<16x256xf32>
    %21 = tpu.matmul %20, %19, %cst_13 {dimension_numbers = #tpu.dot_dimension_numbers<[1], [0], [0], [1], [0, 0, 1, 1], [], []>} : vector<16x32xf32>, vector<32x256xf32>, vector<16x256xf32> -> vector<16x256xf32>
    %cst_14 = arith.constant dense<0xFF800000> : vector<256xf32>
    %22 = vector.multi_reduction <maximumf>, %21, %cst_14 [0] : vector<16x256xf32> to vector<256xf32>
    %23 = vector.shape_cast %22 : vector<256xf32> to vector<1x256xf32>
    %24 = vector.broadcast %23 : vector<1x256xf32> to vector<16x256xf32>
    %25 = arith.subf %21, %24 : vector<16x256xf32>
    %26 = math.exp %25 : vector<16x256xf32>
    %c0_15 = arith.constant 0 : index
    %c0_16 = arith.constant 0 : index
    %27 = vector.load %arg7[%c0_15, %c0_16] : memref<8x16xf32, #tpu.memory_space<vmem>>, vector<8x16xf32>
    %cst_17 = arith.constant dense<0.000000e+00> : vector<8x256xf32>
    %28 = tpu.matmul %27, %26, %cst_17 {dimension_numbers = #tpu.dot_dimension_numbers<[1], [0], [0], [1], [0, 0, 1, 1], [], []>} : vector<8x16xf32>, vector<16x256xf32>, vector<8x256xf32> -> vector<8x256xf32>
    %29 = math.log %28 : vector<8x256xf32>
    %30 = vector.broadcast %23 : vector<1x256xf32> to vector<8x256xf32>
    %31 = arith.addf %29, %30 : vector<8x256xf32>
    %cst_18 = arith.constant dense<0xFF800000> : vector<256xf32>
    %32 = vector.multi_reduction <maximumf>, %31, %cst_18 [0] : vector<8x256xf32> to vector<256xf32>
    %33 = vector.shape_cast %32 : vector<256xf32> to vector<1x256xf32>
    %34 = vector.broadcast %33 : vector<1x256xf32> to vector<8x256xf32>
    %35 = arith.subf %31, %34 : vector<8x256xf32>
    %36 = math.exp %35 : vector<8x256xf32>
    %c0_19 = arith.constant 0 : index
    %c0_20 = arith.constant 0 : index
    %37 = vector.load %arg8[%c0_19, %c0_20] : memref<1x8xf32, #tpu.memory_space<vmem>>, vector<1x8xf32>
    %cst_21 = arith.constant dense<0.000000e+00> : vector<1x256xf32>
    %38 = tpu.matmul %37, %36, %cst_21 {dimension_numbers = #tpu.dot_dimension_numbers<[1], [0], [0], [1], [0, 0, 1, 1], [], []>} : vector<1x8xf32>, vector<8x256xf32>, vector<1x256xf32> -> vector<1x256xf32>
    %39 = math.log %38 : vector<1x256xf32>
    %40 = arith.addf %39, %33 : vector<1x256xf32>
    %c0_22 = arith.constant 0 : index
    %c0_23 = arith.constant 0 : index
    %41 = vector.load %arg9[%c0_22, %c0_23] : memref<1x256xf32, #tpu.memory_space<vmem>>, vector<1x256xf32>
    tpu.vector_store %arg9[%c0_22, %c0_23], %40 {strides = array<i32>} : memref<1x256xf32, #tpu.memory_space<vmem>>, vector<1x256xf32>,
    return
  }
  func.func @transform_0(%arg0: i32) -> (i32, i32) {
    %c0_i32 = arith.constant 0 : i32
    %c0_i32_0 = arith.constant 0 : i32
    return %c0_i32, %arg0 : i32, i32
  }
  func.func @transform_1(%arg0: i32) -> (i32, i32) {
    %c0_i32 = arith.constant 0 : i32
    %c0_i32_0 = arith.constant 0 : i32
    return %c0_i32, %arg0 : i32, i32
  }
  func.func @transform_2(%arg0: i32) -> (i32, i32) {
    %c0_i32 = arith.constant 0 : i32
    %c0_i32_0 = arith.constant 0 : i32
    %c0_i32_1 = arith.constant 0 : i32
    return %c0_i32, %c0_i32_0 : i32, i32
  }
  func.func @transform_3(%arg0: i32) -> (i32, i32) {
    %c0_i32 = arith.constant 0 : i32
    %c0_i32_0 = arith.constant 0 : i32
    %c0_i32_1 = arith.constant 0 : i32
    return %c0_i32, %c0_i32_0 : i32, i32
  }
  func.func @transform_4(%arg0: i32) -> (i32, i32) {
    %c0_i32 = arith.constant 0 : i32
    %c0_i32_0 = arith.constant 0 : i32
    %c0_i32_1 = arith.constant 0 : i32
    return %c0_i32, %c0_i32_0 : i32, i32
  }
  func.func @transform_5(%arg0: i32) -> (i32, i32) {
    %c0_i32 = arith.constant 0 : i32
    %c0_i32_0 = arith.constant 0 : i32
    %c0_i32_1 = arith.constant 0 : i32
    return %c0_i32, %c0_i32_0 : i32, i32
  }
  func.func @transform_6(%arg0: i32) -> (i32, i32) {
    %c0_i32 = arith.constant 0 : i32
    %c0_i32_0 = arith.constant 0 : i32
    %c0_i32_1 = arith.constant 0 : i32
    return %c0_i32, %c0_i32_0 : i32, i32
  }
  func.func @transform_7(%arg0: i32) -> (i32, i32) {
    %c0_i32 = arith.constant 0 : i32
    %c0_i32_0 = arith.constant 0 : i32
    %c0_i32_1 = arith.constant 0 : i32
    return %c0_i32, %c0_i32_0 : i32, i32
  }
  func.func @transform_8(%arg0: i32) -> (i32, i32) {
    %c0_i32 = arith.constant 0 : i32
    %c0_i32_0 = arith.constant 0 : i32
    return %c0_i32, %arg0 : i32, i32
  }
}

</mosaic_0001>

<llo_original>
// kernel: tpu_custom_call.1
$region0: #{tpu_custom_call.1}
  #allocation0 [shape = 'u32[]', space=smem, size = 0x4, offset = 0x4, fixed_abs, tag = 'smem constant byte address 0x4 - core index']
  #allocation1 [shape = 'u32[72,128]{1,0:T(1,128)}', space=vmem, size = 0x9000, scoped, tag = 'internal scratch']
  %s0 = inlined_call_operand.vmem [shape: bf16[32,512], index: 0, kind: input, shape index: {}]
  %s1 = inlined_call_operand.vmem [shape: s8[32,512], index: 1, kind: input, shape index: {}]
  %s2 = inlined_call_operand.vmem [shape: f32[32,1], index: 2, kind: input, shape index: {}]
  %s3 = inlined_call_operand.vmem [shape: f32[32,1], index: 3, kind: input, shape index: {}]
  %s4 = inlined_call_operand.vmem [shape: f32[32,1], index: 4, kind: input, shape index: {}]
  %s5 = inlined_call_operand.hbm [shape: f32[16,32], index: 5, kind: input, shape index: {}]
  %s6 = inlined_call_operand.hbm [shape: f32[8,16], index: 6, kind: input, shape index: {}]
  %s7 = inlined_call_operand.vmem [shape: f32[1,8], index: 7, kind: input, shape index: {}]
  %s8 = inlined_call_operand.hbm [shape: f32[1,512], index: 8, kind: output, shape index: {}]
  %s9 = sld [smem:[#allocation0]]
  $region111: #{tpu_custom_call.1} parent=0
    _
  %s11 = ssub.s32 1, %s9
  %s12 = scalar_select 0, %s11, %s9
  $region1: #{tpu_custom_call.1} parent=0
    #allocation2 [shape = 'u8[32768]{0}', space=vmem, size = 0x8000, scoped, tag = 'input window, operand 0']
    #allocation3 [shape = 'u8[8192]{0}', space=vmem, size = 0x2000, scoped, tag = 'input window, operand 5, single buffered']
    #allocation4 [shape = 's32[2]{0}', space=sflag, size = 0x8, scoped, tag = 'scoped memory for tpu_custom_call.1']
    #allocation5 [shape = 's32[2]{0}', space=sflag, size = 0x8, scoped, tag = 'scoped memory for tpu_custom_call.1']
    #allocation6 [shape = 'u8[4096]{0}', space=vmem, size = 0x1000, scoped, tag = 'input window, operand 6, single buffered']
    #allocation7 [shape = 's32[1]{0}', space=sflag, size = 0x4, scoped, tag = 'scoped memory for tpu_custom_call.1']
    #allocation8 [shape = 'u8[2048]{0}', space=vmem, size = 0x800, scoped, tag = 'output window, operand 0']
    %13 = vsyncpa [#allocation4], 0
    %14 = vsyncpa [#allocation7], 0
    %15 = vsyncpa [#allocation5], 0
    %s16 = scalar_lea.sflag [#allocation5], 1
    %17 = vsyncpa %s16, 0
    loop: start=0, step=1, limit=4
    $region2: #{tpu_custom_call.1} parent=1 // loop_pre_header
      _
    $region3: #{tpu_custom_call.1} parent=1 // loop_header
      %s19 = sphi 0, %s23
      %p20 = scmp.ge.s32.totalorder %s19, 4
      %s29 = sphi 0, %s31
      %s32 = sphi 0, %s29
      %s33 = sphi 0, %s32
      %s49 = sphi 0, %s33
      %s55 = sphi 0, %s57
      %s58 = sphi 0, %s55
      %s59 = sphi 0, %s58
      %s75 = sphi 0, %s59
      %s79 = sphi 0, %s79
      %s81 = sphi 0, %s79
      %s82 = sphi 0, %s81
      %s96 = sphi 0, %s82
      %s100 = sphi 0, %s100
      %s102 = sphi 0, %s100
      %s103 = sphi 0, %s102
      %s117 = sphi 0, %s103
      %s121 = sphi 0, %s121
      %s123 = sphi 0, %s121
      %s124 = sphi 0, %s123
      %s138 = sphi 0, %s124
      %s142 = sphi 0, %s142
      %s144 = sphi 0, %s142
      %s145 = sphi 0, %s144
      %s159 = sphi 0, %s145
      %s163 = sphi 0, %s163
      %s165 = sphi 0, %s163
      %s166 = sphi 0, %s165
      %s180 = sphi 0, %s166
      %s184 = sphi 0, %s184
      %s186 = sphi 0, %s184
      %s187 = sphi 0, %s186
      %s201 = sphi 0, %s187
      %s207 = sphi 0, %s209
      %s210 = sphi 0, %s207
      %s211 = sphi 0, %s210
      %s227 = sphi 0, %s211
    $region4: #{tpu_custom_call.1} parent=1 // loop_header_branch
      %22 = sbr.rel (%p20) target = $region8
    $region5: #{tpu_custom_call.1} parent=1 // loop_body
      %s24 = ssub.s32 %s19, 1
      %s25 = ssub.s32 %s19, 2
      %s26 = sadd.s32 %s19, 1
      %s27 = ssub.s32 %s19, %s26
      %p28 = scmp.eq.s32.totalorder %s27, 0
      %s30 = sadd.s32 %s29, 1
      %s31 = scalar_select %p28, %s29, %s30
      %p34 = pneg %p28
      %p35 = scmp.eq.s32.totalorder %s19, 1
      %p36 = por %p34, %p35
      %p37 = scmp.ne.s32.totalorder %s29, %s32
      %p38 = scmp.eq.s32.totalorder %s19, 0
      %p39 = por %p37, %p38
      %p40 = scmp.ne.s32.totalorder %s29, %s32
      %p41 = scmp.eq.s32.totalorder %s24, 1
      %p42 = por %p40, %p41
      %p43 = scmp.ne.s32.totalorder %s32, %s33
      %p44 = scmp.eq.s32.totalorder %s24, 0
      %p45 = por %p43, %p44
      %p46 = scmp.ne.s32.totalorder %s32, %s33
      %p47 = scmp.eq.s32.totalorder %s25, 1
      %p48 = por %p46, %p47
      %p50 = scmp.ne.s32.totalorder %s33, %s49
      %p51 = scmp.eq.s32.totalorder %s25, 0
      %p52 = por %p50, %p51
      %s53 = ssub.s32 %s19, %s26
      %p54 = scmp.eq.s32.totalorder %s53, 0
      %s56 = sadd.s32 %s55, 1
      %s57 = scalar_select %p54, %s55, %s56
      %p60 = pneg %p54
      %p61 = scmp.eq.s32.totalorder %s19, 1
      %p62 = por %p60, %p61
      %p63 = scmp.ne.s32.totalorder %s55, %s58
      %p64 = scmp.eq.s32.totalorder %s19, 0
      %p65 = por %p63, %p64
      %p66 = scmp.ne.s32.totalorder %s55, %s58
      %p67 = scmp.eq.s32.totalorder %s24, 1
      %p68 = por %p66, %p67
      %p69 = scmp.ne.s32.totalorder %s58, %s59
      %p70 = scmp.eq.s32.totalorder %s24, 0
      %p71 = por %p69, %p70
      %p72 = scmp.ne.s32.totalorder %s58, %s59
      %p73 = scmp.eq.s32.totalorder %s25, 1
      %p74 = por %p72, %p73
      %p76 = scmp.ne.s32.totalorder %s59, %s75
      %p77 = scmp.eq.s32.totalorder %s25, 0
      %p78 = por %p76, %p77
      %s80 = sadd.s32 %s79, 1
      %p83 = scmp.eq.s32.totalorder %s19, 1
      %p84 = scmp.ne.s32.totalorder %s79, %s81
      %p85 = scmp.eq.s32.totalorder %s19, 0
      %p86 = por %p84, %p85
      %p87 = scmp.ne.s32.totalorder %s79, %s81
      %p88 = scmp.eq.s32.totalorder %s24, 1
      %p89 = por %p87, %p88
      %p90 = scmp.ne.s32.totalorder %s81, %s82
      %p91 = scmp.eq.s32.totalorder %s24, 0
      %p92 = por %p90, %p91
      %p93 = scmp.ne.s32.totalorder %s81, %s82
      %p94 = scmp.eq.s32.totalorder %s25, 1
      %p95 = por %p93, %p94
      %p97 = scmp.ne.s32.totalorder %s82, %s96
      %p98 = scmp.eq.s32.totalorder %s25, 0
      %p99 = por %p97, %p98
      %s101 = sadd.s32 %s100, 1
      %p104 = scmp.eq.s32.totalorder %s19, 1
      %p105 = scmp.ne.s32.totalorder %s100, %s102
      %p106 = scmp.eq.s32.totalorder %s19, 0
      %p107 = por %p105, %p106
      %p108 = scmp.ne.s32.totalorder %s100, %s102
      %p109 = scmp.eq.s32.totalorder %s24, 1
      %p110 = por %p108, %p109
      %p111 = scmp.ne.s32.totalorder %s102, %s103
      %p112 = scmp.eq.s32.totalorder %s24, 0
      %p113 = por %p111, %p112
      %p114 = scmp.ne.s32.totalorder %s102, %s103
      %p115 = scmp.eq.s32.totalorder %s25, 1
      %p116 = por %p114, %p115
      %p118 = scmp.ne.s32.totalorder %s103, %s117
      %p119 = scmp.eq.s32.totalorder %s25, 0
      %p120 = por %p118, %p119
      %s122 = sadd.s32 %s121, 1
      %p125 = scmp.eq.s32.totalorder %s19, 1
      %p126 = scmp.ne.s32.totalorder %s121, %s123
      %p127 = scmp.eq.s32.totalorder %s19, 0
      %p128 = por %p126, %p127
      %p129 = scmp.ne.s32.totalorder %s121, %s123
      %p130 = scmp.eq.s32.totalorder %s24, 1
      %p131 = por %p129, %p130
      %p132 = scmp.ne.s32.totalorder %s123, %s124
      %p133 = scmp.eq.s32.totalorder %s24, 0
      %p134 = por %p132, %p133
      %p135 = scmp.ne.s32.totalorder %s123, %s124
      %p136 = scmp.eq.s32.totalorder %s25, 1
      %p137 = por %p135, %p136
      %p139 = scmp.ne.s32.totalorder %s124, %s138
      %p140 = scmp.eq.s32.totalorder %s25, 0
      %p141 = por %p139, %p140
      %s143 = sadd.s32 %s142, 1
      %p146 = scmp.eq.s32.totalorder %s19, 1
      %p147 = scmp.ne.s32.totalorder %s142, %s144
      %p148 = scmp.eq.s32.totalorder %s19, 0
      %p149 = por %p147, %p148
      %p150 = scmp.ne.s32.totalorder %s142, %s144
      %p151 = scmp.eq.s32.totalorder %s24, 1
      %p152 = por %p150, %p151
      %p153 = scmp.ne.s32.totalorder %s144, %s145
      %p154 = scmp.eq.s32.totalorder %s24, 0
      %p155 = por %p153, %p154
      %p156 = scmp.ne.s32.totalorder %s144, %s145
      %p157 = scmp.eq.s32.totalorder %s25, 1
      %p158 = por %p156, %p157
      %p160 = scmp.ne.s32.totalorder %s145, %s159
      %p161 = scmp.eq.s32.totalorder %s25, 0
      %p162 = por %p160, %p161
      %s164 = sadd.s32 %s163, 1
      %p167 = scmp.eq.s32.totalorder %s19, 1
      %p168 = scmp.ne.s32.totalorder %s163, %s165
      %p169 = scmp.eq.s32.totalorder %s19, 0
      %p170 = por %p168, %p169
      %p171 = scmp.ne.s32.totalorder %s163, %s165
      %p172 = scmp.eq.s32.totalorder %s24, 1
      %p173 = por %p171, %p172
      %p174 = scmp.ne.s32.totalorder %s165, %s166
      %p175 = scmp.eq.s32.totalorder %s24, 0
      %p176 = por %p174, %p175
      %p177 = scmp.ne.s32.totalorder %s165, %s166
      %p178 = scmp.eq.s32.totalorder %s25, 1
      %p179 = por %p177, %p178
      %p181 = scmp.ne.s32.totalorder %s166, %s180
      %p182 = scmp.eq.s32.totalorder %s25, 0
      %p183 = por %p181, %p182
      %s185 = sadd.s32 %s184, 1
      %p188 = scmp.eq.s32.totalorder %s19, 1
      %p189 = scmp.ne.s32.totalorder %s184, %s186
      %p190 = scmp.eq.s32.totalorder %s19, 0
      %p191 = por %p189, %p190
      %p192 = scmp.ne.s32.totalorder %s184, %s186
      %p193 = scmp.eq.s32.totalorder %s24, 1
      %p194 = por %p192, %p193
      %p195 = scmp.ne.s32.totalorder %s186, %s187
      %p196 = scmp.eq.s32.totalorder %s24, 0
      %p197 = por %p195, %p196
      %p198 = scmp.ne.s32.totalorder %s186, %s187
      %p199 = scmp.eq.s32.totalorder %s25, 1
      %p200 = por %p198, %p199
      %p202 = scmp.ne.s32.totalorder %s187, %s201
      %p203 = scmp.eq.s32.totalorder %s25, 0
      %p204 = por %p202, %p203
      %s205 = ssub.s32 %s19, %s26
      %p206 = scmp.eq.s32.totalorder %s205, 0
      %s208 = sadd.s32 %s207, 1
      %s209 = scalar_select %p206, %s207, %s208
      %p212 = pneg %p206
      %p213 = scmp.eq.s32.totalorder %s19, 1
      %p214 = por %p212, %p213
      %p215 = scmp.ne.s32.totalorder %s207, %s210
      %p216 = scmp.eq.s32.totalorder %s19, 0
      %p217 = por %p215, %p216
      %p218 = scmp.ne.s32.totalorder %s207, %s210
      %p219 = scmp.eq.s32.totalorder %s24, 1
      %p220 = por %p218, %p219
      %p221 = scmp.ne.s32.totalorder %s210, %s211
      %p222 = scmp.eq.s32.totalorder %s24, 0
      %p223 = por %p221, %p222
      %p224 = scmp.ne.s32.totalorder %s210, %s211
      %p225 = scmp.eq.s32.totalorder %s25, 1
      %p226 = por %p224, %p225
      %p228 = scmp.ne.s32.totalorder %s211, %s227
      %p229 = scmp.eq.s32.totalorder %s25, 0
      %p230 = por %p228, %p229
      %p231 = scmp.le.s32.totalorder 1, %s19
      %p232 = scmp.lt.s32.totalorder %s19, 3
      %p233 = pnand %p231, %p232
      %p234 = pneg %p233
      // Predicated region
      $region9: #{tpu_custom_call.1} parent=5 // pred_check
        _
      $region10: #{tpu_custom_call.1} parent=5 // pred_check_branch
        %236 = sbr.rel (%p233) target = $region12
      $region11: #{tpu_custom_call.1} parent=5 // pred_region
        %s237 = ssub.s32 %s19, 1
        // Predicated region
        $region13: #{tpu_custom_call.1} parent=11 // pred_check
          %p238 = pneg %p92
        $region14: #{tpu_custom_call.1} parent=11 // pred_check_branch
          %240 = sbr.rel (%p238) target = $region16
        $region15: #{tpu_custom_call.1} parent=11 // pred_region
          _
        $region16: #{tpu_custom_call.1} parent=11 // pred_fallthru
          _
        // Predicated region
        $region17: #{tpu_custom_call.1} parent=11 // pred_check
          %p241 = pneg %p113
        $region18: #{tpu_custom_call.1} parent=11 // pred_check_branch
          %243 = sbr.rel (%p241) target = $region20
        $region19: #{tpu_custom_call.1} parent=11 // pred_region
          _
        $region20: #{tpu_custom_call.1} parent=11 // pred_fallthru
          _
        // Predicated region
        $region21: #{tpu_custom_call.1} parent=11 // pred_check
          %p244 = pneg %p134
        $region22: #{tpu_custom_call.1} parent=11 // pred_check_branch
          %246 = sbr.rel (%p244) target = $region24
        $region23: #{tpu_custom_call.1} parent=11 // pred_region
          _
        $region24: #{tpu_custom_call.1} parent=11 // pred_fallthru
          _
        // Predicated region
        $region25: #{tpu_custom_call.1} parent=11 // pred_check
          %p247 = pneg %p155
        $region26: #{tpu_custom_call.1} parent=11 // pred_check_branch
          %249 = sbr.rel (%p247) target = $region28
        $region27: #{tpu_custom_call.1} parent=11 // pred_region
          %251 = vsyncadd [#allocation4], 0
          %s252 = sshll.u32 %s5, 4
          %s253 = int_to_ptr.hbm [resolvable:$true] %s252
          %s254 = sshll.u32 [#allocation3], 4
          %s255 = int_to_ptr.vmem [resolvable:$true] %s254
          %260 = dma.hbm_to_vmem [thread:$0]  %s253, 256, %s255, [#allocation4], 128, 128, 8
        $region28: #{tpu_custom_call.1} parent=11 // pred_fallthru
          _
        // Predicated region
        $region29: #{tpu_custom_call.1} parent=11 // pred_check
          %p261 = pneg %p176
        $region30: #{tpu_custom_call.1} parent=11 // pred_check_branch
          %263 = sbr.rel (%p261) target = $region32
        $region31: #{tpu_custom_call.1} parent=11 // pred_region
          %265 = vsyncadd [#allocation7], 0
          %s267 = sshll.u32 %s6, 4
          %s268 = int_to_ptr.hbm [resolvable:$true] %s267
          %s269 = sshll.u32 [#allocation6], 4
          %s270 = int_to_ptr.vmem [resolvable:$true] %s269
          %272 = dma.hbm_to_vmem [thread:$0]  %s268, 128, %s270, [#allocation7]
        $region32: #{tpu_custom_call.1} parent=11 // pred_fallthru
          _
        // Predicated region
        $region33: #{tpu_custom_call.1} parent=11 // pred_check
          %p273 = pneg %p197
        $region34: #{tpu_custom_call.1} parent=11 // pred_check_branch
          %275 = sbr.rel (%p273) target = $region36
        $region35: #{tpu_custom_call.1} parent=11 // pred_region
          _
        $region36: #{tpu_custom_call.1} parent=11 // pred_fallthru
          _
      $region12: #{tpu_custom_call.1} parent=5 // pred_fallthru
        _
      %p276 = scmp.lt.s32.totalorder %s19, 2
      // Predicated region
      $region37: #{tpu_custom_call.1} parent=5 // pred_check
        %p277 = pneg %p276
      $region38: #{tpu_custom_call.1} parent=5 // pred_check_branch
        %279 = sbr.rel (%p277) target = $region40
      $region39: #{tpu_custom_call.1} parent=5 // pred_region
        // Predicated region
        $region41: #{tpu_custom_call.1} parent=39 // pred_check
          %p280 = pneg %p39
        $region42: #{tpu_custom_call.1} parent=39 // pred_check_branch
          %282 = sbr.rel (%p280) target = $region44
        $region43: #{tpu_custom_call.1} parent=39 // pred_region
          %s283 = sand.u32 %s29, 1
          %s284 = sand.u32 %s29, 1
          %s285 = smul.addr %s284, 32
          %s286 = scalar_lea.vmem [#allocation2], %s285
          %s287 = smul.u32 2, %s19
          %s288 = smul.addr %s287, 4
          %s289 = scalar_lea.vmem %s0, %s288
          // Predicated region
          $region45: #{tpu_custom_call.1} parent=43 // pred_check
            _
          $region46: #{tpu_custom_call.1} parent=43 // pred_check_branch
            %291 = sbr.rel (0) target = $region48
          $region47: #{tpu_custom_call.1} parent=43 // pred_region
            // Predicated region
            $region49: #{tpu_custom_call.1} parent=47 // pred_check
              _
            $region50: #{tpu_custom_call.1} parent=47 // pred_check_branch
              %293 = sbr.rel (0) target = $region52
            $region51: #{tpu_custom_call.1} parent=47 // pred_region
              // Predicated region
              $region64: #{tpu_custom_call.1} parent=51 // pred_check
                _
              $region65: #{tpu_custom_call.1} parent=51 // pred_check_branch
                %315 = sbr.rel (0) target = $region67
              $region66: #{tpu_custom_call.1} parent=51 // pred_region
                loop: start=0, step=1, limit=1
                $region68: #{tpu_custom_call.1} parent=66 // loop_pre_header
                  _
                $region69: #{tpu_custom_call.1} parent=66 // loop_header
                  %s317 = sphi 0, %s321
                  %p318 = scmp.ge.s32.totalorder %s317, 1
                  %s322 = sphi %s289, %s289
                  %s323 = sphi %s286, %s286
                $region70: #{tpu_custom_call.1} parent=66 // loop_header_branch
                  %320 = sbr.rel (%p318) target = $region74
                $region71: #{tpu_custom_call.1} parent=66 // loop_body
                  %v324 = vld [vmem:[%s322] sm:$0xff]
                  %325 = vst [vmem:[%s323] sm:$0xff] %v324
                  %v326 = vld [vmem:[%s322 + $0x10] sm:$0xff]
                  %327 = vst [vmem:[%s323 + $0x8] sm:$0xff] %v326
                  %v328 = vld [vmem:[%s322 + $0x20] sm:$0xff]
                  %329 = vst [vmem:[%s323 + $0x10] sm:$0xff] %v328
                  %v330 = vld [vmem:[%s322 + $0x30] sm:$0xff]
                  %331 = vst [vmem:[%s323 + $0x18] sm:$0xff] %v330
                $region72: #{tpu_custom_call.1} parent=66 // loop_footer
                  %s321 = sadd.s32 1, %s317
                $region73: #{tpu_custom_call.1} parent=66 // loop_footer_branch
                  %316 = sbr.rel target = $region69
                $region74: #{tpu_custom_call.1} parent=66 // loop_exit
                  _
              $region67: #{tpu_custom_call.1} parent=51 // pred_fallthru
                _
              // Predicated region
              $region75: #{tpu_custom_call.1} parent=51 // pred_check
                _
              $region76: #{tpu_custom_call.1} parent=51 // pred_check_branch
                %333 = sbr.rel target = $region78
              $region77: #{tpu_custom_call.1} parent=51 // pred_region
                _
              $region78: #{tpu_custom_call.1} parent=51 // pred_fallthru
                _
            $region52: #{tpu_custom_call.1} parent=47 // pred_fallthru
              _
            // Predicated region
            $region53: #{tpu_custom_call.1} parent=47 // pred_check
              _
            $region54: #{tpu_custom_call.1} parent=47 // pred_check_branch
              %295 = sbr.rel target = $region56
            $region55: #{tpu_custom_call.1} parent=47 // pred_region
              %s297 = ssub.s32 256, 1
              loop: start=0, step=1, limit=1
              $region57: #{tpu_custom_call.1} parent=55 // loop_pre_header
                _
              $region58: #{tpu_custom_call.1} parent=55 // loop_header
                %s299 = sphi 0, %s303
                %p300 = scmp.ge.s32.totalorder %s299, 1
                %s304 = sphi %s289, %s289
                %s305 = sphi %s286, %s286
              $region59: #{tpu_custom_call.1} parent=55 // loop_header_branch
                %302 = sbr.rel (%p300) target = $region63
              $region60: #{tpu_custom_call.1} parent=55 // loop_body
                %v306 = vld [vmem:[%s304] sm:%s297]
                %307 = vst [vmem:[%s305] sm:%s297] %v306
                %v308 = vld [vmem:[%s304 + $0x10] sm:%s297]
                %309 = vst [vmem:[%s305 + $0x8] sm:%s297] %v308
                %v310 = vld [vmem:[%s304 + $0x20] sm:%s297]
                %311 = vst [vmem:[%s305 + $0x10] sm:%s297] %v310
                %v312 = vld [vmem:[%s304 + $0x30] sm:%s297]
                %313 = vst [vmem:[%s305 + $0x18] sm:%s297] %v312
              $region61: #{tpu_custom_call.1} parent=55 // loop_footer
                %s303 = sadd.s32 1, %s299
              $region62: #{tpu_custom_call.1} parent=55 // loop_footer_branch
                %298 = sbr.rel target = $region58
              $region63: #{tpu_custom_call.1} parent=55 // loop_exit
                _
            $region56: #{tpu_custom_call.1} parent=47 // pred_fallthru
              _
          $region48: #{tpu_custom_call.1} parent=43 // pred_fallthru
            _
          %334 = vnop
        $region44: #{tpu_custom_call.1} parent=39 // pred_fallthru
          _
        // Predicated region
        $region79: #{tpu_custom_call.1} parent=39 // pred_check
          %p335 = pneg %p65
        $region80: #{tpu_custom_call.1} parent=39 // pred_check_branch
          %337 = sbr.rel (%p335) target = $region82
        $region81: #{tpu_custom_call.1} parent=39 // pred_region
          %s338 = smul.u32 2, %s19
          %p339 = scmp.lt.s32.totalorder %s338, 3
          %s340 = scalar_select %p339, %s338, 3
          %s341 = smul.addr %s340, 8
          %s342 = scalar_lea.vmem %s1, %s341
          %s343 = smul.u32 2, %s19
        $region82: #{tpu_custom_call.1} parent=39 // pred_fallthru
          _
      $region40: #{tpu_custom_call.1} parent=5 // pred_fallthru
        _
      %p344 = scmp.le.s32.totalorder 1, %s19
      %p345 = scmp.lt.s32.totalorder %s19, 3
      %p346 = pnand %p344, %p345
      %p347 = pneg %p346
      // Predicated region
      $region83: #{tpu_custom_call.1} parent=5 // pred_check
        _
      $region84: #{tpu_custom_call.1} parent=5 // pred_check_branch
        %349 = sbr.rel (%p346) target = $region86
      $region85: #{tpu_custom_call.1} parent=5 // pred_region
        %s350 = ssub.s32 %s19, 1
        %s351 = sand.u32 %s32, 1
        %s352 = sand.u32 %s32, 1
        %s353 = smul.addr %s352, 32
        %s354 = scalar_lea.vmem [#allocation2], %s353
        // Predicated region
        $region87: #{tpu_custom_call.1} parent=85 // pred_check
          %p355 = pneg %p45
        $region88: #{tpu_custom_call.1} parent=85 // pred_check_branch
          %357 = sbr.rel (%p355) target = $region90
        $region89: #{tpu_custom_call.1} parent=85 // pred_region
          _
        $region90: #{tpu_custom_call.1} parent=85 // pred_fallthru
          _
        // Predicated region
        $region91: #{tpu_custom_call.1} parent=85 // pred_check
          %p358 = pneg %p155
        $region92: #{tpu_custom_call.1} parent=85 // pred_check_branch
          %360 = sbr.rel (%p358) target = $region94
        $region93: #{tpu_custom_call.1} parent=85 // pred_region
          %362 = dma.done [#allocation4], 256
        $region94: #{tpu_custom_call.1} parent=85 // pred_fallthru
          _
        // Predicated region
        $region95: #{tpu_custom_call.1} parent=85 // pred_check
          %p363 = pneg %p176
        $region96: #{tpu_custom_call.1} parent=85 // pred_check_branch
          %365 = sbr.rel (%p363) target = $region98
        $region97: #{tpu_custom_call.1} parent=85 // pred_region
          %367 = dma.done [#allocation7], 128
        $region98: #{tpu_custom_call.1} parent=85 // pred_fallthru
          _
        %s368 = sand.u32 %s32, 1
        %s369 = sand.u32 %s32, 1
        %s370 = smul.addr %s369, 32
        %s371 = scalar_lea.vmem [#allocation2], %s370
        %p372 = pneg %p45
        %p373 = pneg %p42
        %s374 = smul.u32 2, %s24
        %p375 = scmp.lt.s32.totalorder %s374, 3
        %s376 = scalar_select %p375, %s374, 3
        %s377 = smul.addr %s376, 8
        %s378 = scalar_lea.vmem %s1, %s377
        %p379 = pneg %p71
        %p380 = pneg %p68
        %p381 = pneg %p92
        %p382 = pneg %p89
        %p383 = pneg %p113
        %p384 = pneg %p110
        %p385 = pneg %p134
        %p386 = pneg %p131
        %p387 = pneg %p155
        %p388 = pneg %p152
        %p389 = pneg %p176
        %p390 = pneg %p173
        %p391 = pneg %p197
        %p392 = pneg %p194
        %p393 = pneg %p223
        %p394 = pneg %p220
        %s395 = sand.u32 %s210, 1
        %s396 = scalar_lea.sflag [#allocation5], %s395
        %s397 = sand.u32 %s210, 1
        %s398 = smul.addr %s397, 2
        %s399 = scalar_lea.vmem [#allocation8], %s398
        %s400 = smul.u32 2, %s24
        %s401 = smul.u32 2, %s24
        %p402 = scmp.lt.s32.totalorder %s401, 3
        %s403 = scalar_select %p402, %s401, 3
        %s404 = smul.addr %s403, 8
        %s405 = scalar_lea.vmem %s1, %s404
        %s406 = smul.u32 2, %s24
        %s407 = smul.u32 2, %s24
        %v408 = vld [vmem:[%s354] sm:$0xff]
        %v409 = vld [vmem:[%s354 + $0x8] sm:$0xff]
        %v410 = vld [vmem:[%s354 + $0x10] sm:$0xff]
        %v411 = vld [vmem:[%s354 + $0x18] sm:$0xff]
        %v412 = vunpack.c.l.bf16 %v408
        %v413 = vunpack.c.h.bf16 %v408
        %v414 = vunpack.c.l.bf16 %v409
        %v415 = vunpack.c.h.bf16 %v409
        %v416 = vunpack.c.l.bf16 %v410
        %v417 = vunpack.c.h.bf16 %v410
        %v418 = vunpack.c.l.bf16 %v411
        %v419 = vunpack.c.h.bf16 %v411
        %v420 = vld [vmem:[%s405] sm:$0xff]
        %v421 = vld [vmem:[%s405 + $0x8] sm:$0xff]
        %v422 = vunpack.c.0.s8 %v420
        %v423 = vunpack.c.0.s8 %v421
        %v424 = vunpack.c.1.s8 %v420
        %v425 = vunpack.c.1.s8 %v421
        %v426 = vunpack.c.2.s8 %v420
        %v427 = vunpack.c.2.s8 %v421
        %v428 = vunpack.c.3.s8 %v420
        %v429 = vunpack.c.3.s8 %v421
        %v430 = vcvt.s32.f32 %v422
        %v431 = vcvt.s32.f32 %v423
        %v432 = vcvt.s32.f32 %v424
        %v433 = vcvt.s32.f32 %v425
        %v434 = vcvt.s32.f32 %v426
        %v435 = vcvt.s32.f32 %v427
        %v436 = vcvt.s32.f32 %v428
        %v437 = vcvt.s32.f32 %v429
        %v438 = vld [vmem:[%s2] sm:$0xff]
        %v439 = vld [vmem:[%s2 + $0x8] sm:$0xff]
        %v440 = vld [vmem:[%s2 + $0x10] sm:$0xff]
        %v441 = vld [vmem:[%s2 + $0x18] sm:$0xff]
        %443 = vset.pattern.permute.xlu0 0
        %444 = vperm.xlu0 %443, %v438
        %v445 = vpop.permute.xlu0 %444
        %448 = vset.pattern.permute.xlu0 0
        %449 = vperm.xlu0 %448, %v439
        %v450 = vpop.permute.xlu0 %449
        %453 = vset.pattern.permute.xlu0 0
        %454 = vperm.xlu0 %453, %v440
        %v455 = vpop.permute.xlu0 %454
        %458 = vset.pattern.permute.xlu0 0
        %459 = vperm.xlu0 %458, %v441
        %v460 = vpop.permute.xlu0 %459
        %v462 = vsub.f32 %v412, %v445
        %v463 = vsub.f32 %v413, %v445
        %v464 = vsub.f32 %v414, %v450
        %v465 = vsub.f32 %v415, %v450
        %v466 = vsub.f32 %v416, %v455
        %v467 = vsub.f32 %v417, %v455
        %v468 = vsub.f32 %v418, %v460
        %v469 = vsub.f32 %v419, %v460
        %v470 = vld [vmem:[%s3] sm:$0xff]
        %v471 = vld [vmem:[%s3 + $0x8] sm:$0xff]
        %v472 = vld [vmem:[%s3 + $0x10] sm:$0xff]
        %v473 = vld [vmem:[%s3 + $0x18] sm:$0xff]
        %475 = vset.pattern.permute.xlu0 0
        %476 = vperm.xlu0 %475, %v470
        %v477 = vpop.permute.xlu0 %476
        %480 = vset.pattern.permute.xlu0 0
        %481 = vperm.xlu0 %480, %v471
        %v482 = vpop.permute.xlu0 %481
        %485 = vset.pattern.permute.xlu0 0
        %486 = vperm.xlu0 %485, %v472
        %v487 = vpop.permute.xlu0 %486
        %490 = vset.pattern.permute.xlu0 0
        %491 = vperm.xlu0 %490, %v473
        %v492 = vpop.permute.xlu0 %491
        %v494 = vmul.f32 %v462, %v477
        %v495 = vmul.f32 %v463, %v477
        %v496 = vmul.f32 %v464, %v482
        %v497 = vmul.f32 %v465, %v482
        %v498 = vmul.f32 %v466, %v487
        %v499 = vmul.f32 %v467, %v487
        %v500 = vmul.f32 %v468, %v492
        %v501 = vmul.f32 %v469, %v492
        %v502 = vmul.f32 %v494, %v494
        %v503 = vmul.f32 %v495, %v495
        %v504 = vmul.f32 %v496, %v496
        %v505 = vmul.f32 %v497, %v497
        %v506 = vmul.f32 %v498, %v498
        %v507 = vmul.f32 %v499, %v499
        %v508 = vmul.f32 %v500, %v500
        %v509 = vmul.f32 %v501, %v501
        %v510 = vmul.f32 %v502, -0.5
        %v511 = vmul.f32 %v503, -0.5
        %v512 = vmul.f32 %v504, -0.5
        %v513 = vmul.f32 %v505, -0.5
        %v514 = vmul.f32 %v506, -0.5
        %v515 = vmul.f32 %v507, -0.5
        %v516 = vmul.f32 %v508, -0.5
        %v517 = vmul.f32 %v509, -0.5
        %v518 = vld [vmem:[%s4] sm:$0xff]
        %v519 = vld [vmem:[%s4 + $0x8] sm:$0xff]
        %v520 = vld [vmem:[%s4 + $0x10] sm:$0xff]
        %v521 = vld [vmem:[%s4 + $0x18] sm:$0xff]
        %523 = vset.pattern.permute.xlu0 0
        %524 = vperm.xlu0 %523, %v518
        %v525 = vpop.permute.xlu0 %524
        %528 = vset.pattern.permute.xlu0 0
        %529 = vperm.xlu0 %528, %v519
        %v530 = vpop.permute.xlu0 %529
        %533 = vset.pattern.permute.xlu0 0
        %534 = vperm.xlu0 %533, %v520
        %v535 = vpop.permute.xlu0 %534
        %538 = vset.pattern.permute.xlu0 0
        %539 = vperm.xlu0 %538, %v521
        %v540 = vpop.permute.xlu0 %539
        %v542 = vadd.f32 %v510, %v525
        %v543 = vadd.f32 %v511, %v525
        %v544 = vadd.f32 %v512, %v530
        %v545 = vadd.f32 %v513, %v530
        %v546 = vadd.f32 %v514, %v535
        %v547 = vadd.f32 %v515, %v535
        %v548 = vadd.f32 %v516, %v540
        %v549 = vadd.f32 %v517, %v540
        %vm550 = vcmp.gt.f32.partialorder %v430, 0.0
        %vm551 = vcmp.gt.f32.partialorder %v431, 0.0
        %vm552 = vcmp.gt.f32.partialorder %v432, 0.0
        %vm553 = vcmp.gt.f32.partialorder %v433, 0.0
        %vm554 = vcmp.gt.f32.partialorder %v434, 0.0
        %vm555 = vcmp.gt.f32.partialorder %v435, 0.0
        %vm556 = vcmp.gt.f32.partialorder %v436, 0.0
        %vm557 = vcmp.gt.f32.partialorder %v437, 0.0
        %v558 = vsel %vm550, 0.0, %v542
        %v559 = vsel %vm551, 0.0, %v543
        %v560 = vsel %vm552, 0.0, %v544
        %v561 = vsel %vm553, 0.0, %v545
        %v562 = vsel %vm554, 0.0, %v546
        %v563 = vsel %vm555, 0.0, %v547
        %v564 = vsel %vm556, 0.0, %v548
        %v565 = vsel %vm557, 0.0, %v549
        %v566 = vld [vmem:[#allocation3] sm:$0xff]
        %v567 = vld [vmem:[#allocation3 + $0x8] sm:$0xff]
        %vm568 = vcmask 261120
        %v570 = vsel %vm568, %v566, 0
        %v573 = vsel %vm568, %v567, 0
        %575 = vmatpush.msra.mxu0 0.0
        %576 = vmatpush.msra.mxu0 0.0
        %577 = vmatpush.msra.mxu0 0.0
        %578 = vmatpush.msra.mxu0 0.0
        %579 = vmatpush.msra.mxu0 0.0
        %580 = vmatpush.msra.mxu0 0.0
        %581 = vmatpush.msra.mxu0 0.0
        %582 = vmatpush.msra.mxu0 0.0
        %583 = vmatpush.msra.mxu0 0.0
        %584 = vmatpush.msra.mxu0 0.0
        %585 = vmatpush.msra.mxu0 0.0
        %586 = vmatpush.msra.mxu0 0.0
        %587 = vmatpush.msra.mxu0 %v564
        %588 = vmatpush.msra.mxu0 %v562
        %589 = vmatpush.msra.mxu0 %v560
        %590 = vmatpush.msra.mxu0 %v558
        %591 = vmatmul.f32.gmra.mxu0 %v570
        %v592 = vpop.f32.mrf.mxu0
        %v593 = vadd.f32 0.0, %v592
        %594 = vmatmul.f32.gmra.mxu0 %v573
        %v595 = vpop.f32.mrf.mxu0
        %v596 = vadd.f32 0.0, %v595
        %597 = vdwg.mxu0
        %598 = vmatpush.msra.mxu0 0.0
        %599 = vmatpush.msra.mxu0 0.0
        %600 = vmatpush.msra.mxu0 0.0
        %601 = vmatpush.msra.mxu0 0.0
        %602 = vmatpush.msra.mxu0 0.0
        %603 = vmatpush.msra.mxu0 0.0
        %604 = vmatpush.msra.mxu0 0.0
        %605 = vmatpush.msra.mxu0 0.0
        %606 = vmatpush.msra.mxu0 0.0
        %607 = vmatpush.msra.mxu0 0.0
        %608 = vmatpush.msra.mxu0 0.0
        %609 = vmatpush.msra.mxu0 0.0
        %610 = vmatpush.msra.mxu0 %v565
        %611 = vmatpush.msra.mxu0 %v563
        %612 = vmatpush.msra.mxu0 %v561
        %613 = vmatpush.msra.mxu0 %v559
        %614 = vmatmul.f32.gmra.mxu0 %v570
        %v615 = vpop.f32.mrf.mxu0
        %v616 = vadd.f32 0.0, %v615
        %617 = vmatmul.f32.gmra.mxu0 %v573
        %v618 = vpop.f32.mrf.mxu0
        %v619 = vadd.f32 0.0, %v618
        %620 = vdwg.mxu0
        %v621 = vmax.f32 %v593, %v596
        %v622 = vrot.slane %v621, 4
        %v623 = vmax.f32 %v621, %v622
        %v624 = vrot.slane %v623, 2
        %v625 = vmax.f32 %v623, %v624
        %v626 = vrot.slane %v625, 1
        %v627 = vmax.f32 %v625, %v626
        %v628 = vmax.f32 %v616, %v619
        %v629 = vrot.slane %v628, 4
        %v630 = vmax.f32 %v628, %v629
        %v631 = vrot.slane %v630, 2
        %v632 = vmax.f32 %v630, %v631
        %v633 = vrot.slane %v632, 1
        %v634 = vmax.f32 %v632, %v633
        %v635 = vsub.f32 %v593, %v627
        %v636 = vsub.f32 %v616, %v634
        %v637 = vsub.f32 %v596, %v627
        %v638 = vsub.f32 %v619, %v634
        %v639 = vmul.f32 %v635, 1.442695
        %v640 = vpow.pop %v639
        %v641 = vmul.f32 %v636, 1.442695
        %v642 = vpow.pop %v641
        %v643 = vmul.f32 %v637, 1.442695
        %v644 = vpow.pop %v643
        %v645 = vmul.f32 %v638, 1.442695
        %v646 = vpow.pop %v645
        %v647 = vld [vmem:[#allocation6] sm:$0xff]
        %vm648 = vcmask 130048
        %v650 = vsel %vm648, %v647, 0
        %652 = vmatpush.msra.mxu0 0.0
        %653 = vmatpush.msra.mxu0 0.0
        %654 = vmatpush.msra.mxu0 0.0
        %655 = vmatpush.msra.mxu0 0.0
        %656 = vmatpush.msra.mxu0 0.0
        %657 = vmatpush.msra.mxu0 0.0
        %658 = vmatpush.msra.mxu0 0.0
        %659 = vmatpush.msra.mxu0 0.0
        %660 = vmatpush.msra.mxu0 0.0
        %661 = vmatpush.msra.mxu0 0.0
        %662 = vmatpush.msra.mxu0 0.0
        %663 = vmatpush.msra.mxu0 0.0
        %664 = vmatpush.msra.mxu0 0.0
        %665 = vmatpush.msra.mxu0 0.0
        %666 = vmatpush.msra.mxu0 %v644
        %667 = vmatpush.msra.mxu0 %v640
        %668 = vmatmul.f32.gmra.mxu0 %v650
        %v669 = vpop.f32.mrf.mxu0
        %v670 = vadd.f32 0.0, %v669
        %671 = vdwg.mxu0
        %672 = vmatpush.msra.mxu0 0.0
        %673 = vmatpush.msra.mxu0 0.0
        %674 = vmatpush.msra.mxu0 0.0
        %675 = vmatpush.msra.mxu0 0.0
        %676 = vmatpush.msra.mxu0 0.0
        %677 = vmatpush.msra.mxu0 0.0
        %678 = vmatpush.msra.mxu0 0.0
        %679 = vmatpush.msra.mxu0 0.0
        %680 = vmatpush.msra.mxu0 0.0
        %681 = vmatpush.msra.mxu0 0.0
        %682 = vmatpush.msra.mxu0 0.0
        %683 = vmatpush.msra.mxu0 0.0
        %684 = vmatpush.msra.mxu0 0.0
        %685 = vmatpush.msra.mxu0 0.0
        %686 = vmatpush.msra.mxu0 %v646
        %687 = vmatpush.msra.mxu0 %v642
        %688 = vmatmul.f32.gmra.mxu0 %v650
        %v689 = vpop.f32.mrf.mxu0
        %v690 = vadd.f32 0.0, %v689
        %691 = vdwg.mxu0
        %v692 = vlog2.pop %v670
        %v693 = vmul.f32 %v692, 0.6931472
        %v694 = vlog2.pop %v690
        %v695 = vmul.f32 %v694, 0.6931472
        %v696 = vadd.f32 %v693, %v627
        %v697 = vadd.f32 %v695, %v634
        %v698 = vrot.slane %v696, 4
        %v699 = vmax.f32 %v696, %v698
        %v700 = vrot.slane %v699, 2
        %v701 = vmax.f32 %v699, %v700
        %v702 = vrot.slane %v701, 1
        %v703 = vmax.f32 %v701, %v702
        %v704 = vrot.slane %v697, 4
        %v705 = vmax.f32 %v697, %v704
        %v706 = vrot.slane %v705, 2
        %v707 = vmax.f32 %v705, %v706
        %v708 = vrot.slane %v707, 1
        %v709 = vmax.f32 %v707, %v708
        %v710 = vsub.f32 %v696, %v703
        %v711 = vsub.f32 %v697, %v709
        %v712 = vmul.f32 %v710, 1.442695
        %v713 = vpow.pop %v712
        %v714 = vmul.f32 %v711, 1.442695
        %v715 = vpow.pop %v714
        %v716 = vld [vmem:[%s7] sm:$0x1]
        %vm717 = vcmask 64512
        %v719 = vsel %vm717, %v716, 0
        %721 = vmatpush.msra.mxu0 0.0
        %722 = vmatpush.msra.mxu0 0.0
        %723 = vmatpush.msra.mxu0 0.0
        %724 = vmatpush.msra.mxu0 0.0
        %725 = vmatpush.msra.mxu0 0.0
        %726 = vmatpush.msra.mxu0 0.0
        %727 = vmatpush.msra.mxu0 0.0
        %728 = vmatpush.msra.mxu0 0.0
        %729 = vmatpush.msra.mxu0 0.0
        %730 = vmatpush.msra.mxu0 0.0
        %731 = vmatpush.msra.mxu0 0.0
        %732 = vmatpush.msra.mxu0 0.0
        %733 = vmatpush.msra.mxu0 0.0
        %734 = vmatpush.msra.mxu0 0.0
        %735 = vmatpush.msra.mxu0 0.0
        %736 = vmatpush.msra.mxu0 %v713
        %737 = vmatmul.f32.gmra.mxu0 %v719
        %v738 = vpop.f32.mrf.mxu0
        %v739 = vadd.f32 0.0, %v738
        %740 = vdwg.mxu0
        %741 = vmatpush.msra.mxu0 0.0
        %742 = vmatpush.msra.mxu0 0.0
        %743 = vmatpush.msra.mxu0 0.0
        %744 = vmatpush.msra.mxu0 0.0
        %745 = vmatpush.msra.mxu0 0.0
        %746 = vmatpush.msra.mxu0 0.0
        %747 = vmatpush.msra.mxu0 0.0
        %748 = vmatpush.msra.mxu0 0.0
        %749 = vmatpush.msra.mxu0 0.0
        %750 = vmatpush.msra.mxu0 0.0
        %751 = vmatpush.msra.mxu0 0.0
        %752 = vmatpush.msra.mxu0 0.0
        %753 = vmatpush.msra.mxu0 0.0
        %754 = vmatpush.msra.mxu0 0.0
        %755 = vmatpush.msra.mxu0 0.0
        %756 = vmatpush.msra.mxu0 %v715
        %757 = vmatmul.f32.gmra.mxu0 %v719
        %v758 = vpop.f32.mrf.mxu0
        %v759 = vadd.f32 0.0, %v758
        %760 = vdwg.mxu0
        %v761 = vlog2.pop %v739
        %v762 = vmul.f32 %v761, 0.6931472
        %v763 = vlog2.pop %v759
        %v764 = vmul.f32 %v763, 0.6931472
        %v765 = vadd.f32 %v762, %v703
        %v766 = vadd.f32 %v764, %v709
        %v769 = vrot.slane %v766, 7
        %vm770 = vcmask 1040384
        %v771 = vsel %vm770, %v765, %v769
        %v773 = vlaneseq
        %vm774 = vcmp.ge.s32.totalorder %v773, 0
        %vm775 = vcmp.lt.s32.totalorder %v773, 256
        %vm776 = vmand %vm774, %vm775
        %777 = vst.msk [vmem:[%s399] sm:$0x3] %vm776, %v771
        %s778 = sand.u32 %s210, 1
        %s779 = scalar_lea.sflag [#allocation5], %s778
        %s780 = sand.u32 %s210, 1
        %s781 = smul.addr %s780, 2
        %s782 = scalar_lea.vmem [#allocation8], %s781
        // Predicated region
        $region99: #{tpu_custom_call.1} parent=85 // pred_check
          %p783 = pneg %p220
        $region100: #{tpu_custom_call.1} parent=85 // pred_check_branch
          %785 = sbr.rel (%p783) target = $region102
        $region101: #{tpu_custom_call.1} parent=85 // pred_region
          %s786 = smul.u32 2, %s24
          %788 = vsyncadd %s779, 0
          %s789 = scalar_lea.hbm %s8, %s786
          %s791 = sshll.u32 %s782, 4
          %s792 = int_to_ptr.vmem [resolvable:$true] %s791
          %s793 = sshll.u32 %s789, 4
          %s794 = int_to_ptr.hbm [resolvable:$true] %s793
          %796 = dma.vmem_to_hbm [thread:$0]  %s792, 32, %s794, %s779
        $region102: #{tpu_custom_call.1} parent=85 // pred_fallthru
          _
      $region86: #{tpu_custom_call.1} parent=5 // pred_fallthru
        _
      %p797 = scmp.le.s32.totalorder 2, %s19
      // Predicated region
      $region103: #{tpu_custom_call.1} parent=5 // pred_check
        %p798 = pneg %p797
      $region104: #{tpu_custom_call.1} parent=5 // pred_check_branch
        %800 = sbr.rel (%p798) target = $region106
      $region105: #{tpu_custom_call.1} parent=5 // pred_region
        %s801 = ssub.s32 %s19, 2
        // Predicated region
        $region107: #{tpu_custom_call.1} parent=105 // pred_check
          %p802 = pneg %p226
        $region108: #{tpu_custom_call.1} parent=105 // pred_check_branch
          %804 = sbr.rel (%p802) target = $region110
        $region109: #{tpu_custom_call.1} parent=105 // pred_region
          %s805 = sand.u32 %s211, 1
          %s806 = scalar_lea.sflag [#allocation5], %s805
          %s807 = sand.u32 %s211, 1
          %s808 = smul.addr %s807, 2
          %s809 = scalar_lea.vmem [#allocation8], %s808
          %811 = dma.done %s806, 32
        $region110: #{tpu_custom_call.1} parent=105 // pred_fallthru
          _
      $region106: #{tpu_custom_call.1} parent=5 // pred_fallthru
        _
    $region6: #{tpu_custom_call.1} parent=1 // loop_footer
      %s23 = sadd.s32 1, %s19
    $region7: #{tpu_custom_call.1} parent=1 // loop_footer_branch
      %18 = sbr.rel target = $region3
    $region8: #{tpu_custom_call.1} parent=1 // loop_exit
      _
    %812 = vsyncpa [#allocation4], 1
    %s813 = scalar_lea.sflag [#allocation4], 1
    %814 = vsyncpa %s813, 1
    %815 = vsyncpa [#allocation7], 1
    %816 = vsyncpa [#allocation5], 1
    %s817 = scalar_lea.sflag [#allocation5], 1
    %818 = vsyncpa %s817, 1

</llo_original>
